<compile_context>
chip_gen: v5e
topology: v5e:2x2
jax: 0.10.0
libtpu: 0.0.40
codegen_flags: <defaults>
</compile_context>

<pallas_src>
from functools import partial

import jax
import jax.numpy as jnp
import numpy as np
from jax.experimental import pallas as pl
from jax.experimental.pallas import tpu as pltpu


def _round_up(x, m):
    return ((x + m - 1) // m) * m


def _pick_batch_tile(batch, max_tile=1024):
    """Batch tile: single grid step for small batches; even grid length for big ones."""
    b = _round_up(max(batch, 16), 16)          # 16 = bf16 sublane packing quantum
    if b <= max_tile:
        return b                               # grid = (1,)
    # Even number of tiles so v7x can shard the parallel batch axis across both
    # TensorCores; each tile stays far below VMEM limits.
    n_tiles = 2 * pl.cdiv(b, 2 * max_tile)
    return _round_up(pl.cdiv(b, n_tiles), 16)


def critic_kernel(x_ref, w1_ref, b1_ref, w2a_ref, w2b_ref, b2_ref,
                  w3_ref, b3_ref, out_ref, *, state_dim):
    x = x_ref[...]                              # (tb, state_dim+action_dim) bf16
    s_bf = x[:, :state_dim]
    a_bf = x[:, state_dim:]

    # fc1 + relu (bf16 x bf16 MXU matmul, f32 accumulation)
    h1 = jnp.dot(s_bf, w1_ref[...], preferred_element_type=jnp.float32) + b1_ref[...]
    h1 = jnp.maximum(h1, 0.0)

    # fc2 on concat([h1, action]) == h1 @ W2a + action @ W2b, then relu
    h2 = (jnp.dot(h1.astype(jnp.bfloat16), w2a_ref[...],
                  preferred_element_type=jnp.float32)
          + jnp.dot(a_bf, w2b_ref[...], preferred_element_type=jnp.float32)
          + b2_ref[...])
    h2 = jnp.maximum(h2, 0.0)

    # fc3: single output -> VPU multiply + XLU lane reduce (padded lanes of w3 are 0).
    q = jnp.sum(h2 * w3_ref[...], axis=-1, keepdims=True) + b3_ref[...]
    out_ref[...] = q.astype(out_ref.dtype)


def critic_forward(state, action, params, *, max_tile=1024):
    (w1, b1, w2a, w2b, b2, w3, b3) = params
    B, state_dim = state.shape
    action_dim = action.shape[1]
    in_dim = state_dim + action_dim
    h1p = w1.shape[1]                           # padded hidden_1 (multiple of 128)
    h2p = w2a.shape[1]                          # padded hidden_2 (multiple of 128)

    tb = _pick_batch_tile(B, max_tile)
    b_pad = _round_up(B, tb)
    grid = (b_pad // tb,)

    # Fuse state/action into one batch-advancing bf16 stream (1 DMA per step, no
    # in-kernel casts). Padded rows produce garbage q values that are sliced off.
    x = jnp.concatenate([state, action], axis=1)
    if b_pad != B:
        x = jnp.pad(x, ((0, b_pad - B), (0, 0)))
    x = x.astype(jnp.bfloat16)

    batch_in = pl.BlockSpec((tb, in_dim), lambda i: (i, 0))
    out_spec = pl.BlockSpec((tb, 1), lambda i: (i, 0))
    # Grid-invariant index_map => fetched once, kept VMEM-resident across steps.
    resident = lambda arr: pl.BlockSpec(arr.shape, lambda i: (0, 0))

    flops = 2 * b_pad * (state_dim * h1p + (h1p + action_dim) * h2p + h2p)
    bytes_accessed = (x.size * 2                                   # bf16 fused input
                      + (w1.size + w2a.size + w2b.size) * 2        # bf16 weights
                      + (b1.size + b2.size + w3.size + b3.size) * 4
                      + b_pad * 4)                                 # f32 output

    kernel = partial(critic_kernel, state_dim=state_dim)

    out = pl.pallas_call(
        kernel,
        out_shape=jax.ShapeDtypeStruct((b_pad, 1), jnp.float32),
        grid_spec=pltpu.PrefetchScalarGridSpec(
            num_scalar_prefetch=0,
            grid=grid,
            in_specs=[batch_in,
                      resident(w1), resident(b1),
                      resident(w2a), resident(w2b), resident(b2),
                      resident(w3), resident(b3)],
            out_specs=out_spec,
        ),
        compiler_params=pltpu.CompilerParams(
            dimension_semantics=("parallel",)),
        cost_estimate=pl.CostEstimate(flops=flops, transcendentals=0,
                                      bytes_accessed=bytes_accessed),
    )(x, w1, b1, w2a, w2b, b2, w3, b3)
    return out[:B]


def init_critic_params(key, state_dim, action_dim,
                       hidden_1=400, hidden_2=300, init_w=0.003):
    """Deterministic init mirroring the PyTorch module.

    init_weights(): fan_in(size) uses size[0] == out_features (PyTorch weight is
    (out, in)), so fc1/fc2 weights ~ U(-1/sqrt(out), 1/sqrt(out)); fc3 weight
    ~ U(-init_w, init_w). Biases are NOT touched by init_weights(), so they keep
    nn.Linear's default U(-1/sqrt(in_features), 1/sqrt(in_features)) — including
    fc3.bias ~ U(-1/sqrt(hidden_2), ...), faithful to this exact module.

    Hidden dims are zero-padded to multiples of 128 (lane width) so the kernel
    runs on unmasked lanes; zero padding is exact (relu(0)=0, fc3 reduce sees 0).
    W1/W2a/W2b are stored bf16 (MXU-native, half the DMA bytes); biases and the
    tiny fc3 row stay float32.
    """
    ks = jax.random.split(key, 6)
    u = lambda k, shape, v: jax.random.uniform(k, shape, jnp.float32, -v, v)

    v1 = 1.0 / np.sqrt(hidden_1)               # fan_in() quirk: uses out_features
    v2 = 1.0 / np.sqrt(hidden_2)
    w1 = u(ks[0], (state_dim, hidden_1), v1)                      # (in, out) layout
    b1 = u(ks[1], (1, hidden_1), 1.0 / np.sqrt(state_dim))
    w2 = u(ks[2], (hidden_1 + action_dim, hidden_2), v2)
    b2 = u(ks[3], (1, hidden_2), 1.0 / np.sqrt(hidden_1 + action_dim))
    w3 = u(ks[4], (1, hidden_2), init_w)                          # fc3 weight as a row
    b3 = u(ks[5], (1, 1), 1.0 / np.sqrt(hidden_2))

    h1p = _round_up(hidden_1, 128)
    h2p = _round_up(hidden_2, 128)
    w1 = jnp.pad(w1, ((0, 0), (0, h1p - hidden_1)))
    b1 = jnp.pad(b1, ((0, 0), (0, h1p - hidden_1)))
    w2a = jnp.pad(w2[:hidden_1, :], ((0, h1p - hidden_1), (0, h2p - hidden_2)))
    w2b = jnp.pad(w2[hidden_1:, :], ((0, 0), (0, h2p - hidden_2)))
    b2 = jnp.pad(b2, ((0, 0), (0, h2p - hidden_2)))
    w3 = jnp.pad(w3, ((0, 0), (0, h2p - hidden_2)))               # pad lanes are 0

    return (w1.astype(jnp.bfloat16), b1,
            w2a.astype(jnp.bfloat16), w2b.astype(jnp.bfloat16), b2,
            w3, b3)


def critic_reference(state, action, params):
    """Pure-JAX f32 reference (padding lanes contribute exact zeros)."""
    (w1, b1, w2a, w2b, b2, w3, b3) = params
    w1f = w1.astype(jnp.float32)
    w2f = jnp.concatenate([w2a.astype(jnp.float32), w2b.astype(jnp.float32)], axis=0)
    h1 = jax.nn.relu(state @ w1f + b1)
    cat = jnp.concatenate([h1, action], axis=1)
    h2 = jax.nn.relu(cat @ w2f + b2)
    return h2 @ w3.T + b3


if __name__ == "__main__":
    key = jax.random.PRNGKey(0)
    k_params, k_state, k_action = jax.random.split(key, 3)

    batch = 50             # not a multiple of the tile -> exercises batch padding
    state_dim = 16
    action_dim = 4
    hidden_1 = 400
    hidden_2 = 300

    params = init_critic_params(k_params, state_dim, action_dim,
                                hidden_1=hidden_1, hidden_2=hidden_2)
    state = jax.random.normal(k_state, (batch, state_dim), jnp.float32)
    action = jax.random.normal(k_action, (batch, action_dim), jnp.float32)

    q = critic_forward(state, action, params)
    q = jax.block_until_ready(q)
    assert q.shape == (batch, 1)

    q_ref = critic_reference(state, action, params)
    np.testing.assert_allclose(np.asarray(q), np.asarray(q_ref),
                               rtol=2e-2, atol=5e-3)
    print("KERNEL_OK")
</pallas_src>

<mosaic_0001>
module attributes {stable_mosaic.version = 11 : i64} {
  func.func @critic_kernel(%arg0: i32, %arg1: memref<64x20xbf16, #tpu.memory_space<vmem>>, %arg2: memref<16x512xbf16, #tpu.memory_space<vmem>>, %arg3: memref<1x512xf32, #tpu.memory_space<vmem>>, %arg4: memref<512x384xbf16, #tpu.memory_space<vmem>>, %arg5: memref<4x384xbf16, #tpu.memory_space<vmem>>, %arg6: memref<1x384xf32, #tpu.memory_space<vmem>>, %arg7: memref<1x384xf32, #tpu.memory_space<vmem>>, %arg8: memref<1x1xf32, #tpu.memory_space<vmem>>, %arg9: memref<64x1xf32, #tpu.memory_space<vmem>>) attributes {dimension_semantics = [#tpu.dimension_semantics<parallel>], iteration_bounds = array<i64: 1>, scalar_prefetch = 0 : i64, scratch_operands = 0 : i64, tpu.core_type = #tpu.core_type<tc>, window_params = [{transform_indices = @transform_0, window_bounds = array<i64: 64, 20>}, {pipeline_mode = #tpu.pipeline_mode<synchronous>, transform_indices = @transform_1, window_bounds = array<i64: 16, 512>}, {pipeline_mode = #tpu.pipeline_mode<synchronous>, transform_indices = @transform_2, window_bounds = array<i64: 1, 512>}, {pipeline_mode = #tpu.pipeline_mode<synchronous>, transform_indices = @transform_3, window_bounds = array<i64: 512, 384>}, {pipeline_mode = #tpu.pipeline_mode<synchronous>, transform_indices = @transform_4, window_bounds = array<i64: 4, 384>}, {pipeline_mode = #tpu.pipeline_mode<synchronous>, transform_indices = @transform_5, window_bounds = array<i64: 1, 384>}, {pipeline_mode = #tpu.pipeline_mode<synchronous>, transform_indices = @transform_6, window_bounds = array<i64: 1, 384>}, {pipeline_mode = #tpu.pipeline_mode<synchronous>, transform_indices = @transform_7, window_bounds = array<i64: 1, 1>}, {transform_indices = @transform_8, window_bounds = array<i64: 64, 1>}]} {
    %c0 = arith.constant 0 : index
    %c0_0 = arith.constant 0 : index
    %0 = vector.load %arg1[%c0, %c0_0] : memref<64x20xbf16, #tpu.memory_space<vmem>>, vector<64x20xbf16>
    %1 = vector.extract_strided_slice %0 {offsets = [0, 0], sizes = [64, 16], strides = [1, 1]} : vector<64x20xbf16> to vector<64x16xbf16>
    %2 = vector.extract_strided_slice %0 {offsets = [0, 16], sizes = [64, 4], strides = [1, 1]} : vector<64x20xbf16> to vector<64x4xbf16>
    %c0_1 = arith.constant 0 : index
    %c0_2 = arith.constant 0 : index
    %3 = vector.load %arg2[%c0_1, %c0_2] : memref<16x512xbf16, #tpu.memory_space<vmem>>, vector<16x512xbf16>
    %cst = arith.constant dense<0.000000e+00> : vector<64x512xf32>
    %4 = tpu.matmul %1, %3, %cst {dimension_numbers = #tpu.dot_dimension_numbers<[1], [0], [0], [1], [0, 0, 1, 1], [], []>} : vector<64x16xbf16>, vector<16x512xbf16>, vector<64x512xf32> -> vector<64x512xf32>
    %c0_3 = arith.constant 0 : index
    %c0_4 = arith.constant 0 : index
    %5 = vector.load %arg3[%c0_3, %c0_4] : memref<1x512xf32, #tpu.memory_space<vmem>>, vector<1x512xf32>
    %6 = vector.broadcast %5 : vector<1x512xf32> to vector<64x512xf32>
    %7 = arith.addf %4, %6 : vector<64x512xf32>
    %cst_5 = arith.constant 0.000000e+00 : f32
    %8 = vector.broadcast %cst_5 : f32 to vector<64x512xf32>
    %9 = arith.maximumf %7, %8 : vector<64x512xf32>
    %10 = arith.truncf %9 : vector<64x512xf32> to vector<64x512xbf16>
    %c0_6 = arith.constant 0 : index
    %c0_7 = arith.constant 0 : index
    %11 = vector.load %arg4[%c0_6, %c0_7] : memref<512x384xbf16, #tpu.memory_space<vmem>>, vector<512x384xbf16>
    %cst_8 = arith.constant dense<0.000000e+00> : vector<64x384xf32>
    %12 = tpu.matmul %10, %11, %cst_8 {dimension_numbers = #tpu.dot_dimension_numbers<[1], [0], [0], [1], [0, 0, 1, 1], [], []>} : vector<64x512xbf16>, vector<512x384xbf16>, vector<64x384xf32> -> vector<64x384xf32>
    %c0_9 = arith.constant 0 : index
    %c0_10 = arith.constant 0 : index
    %13 = vector.load %arg5[%c0_9, %c0_10] : memref<4x384xbf16, #tpu.memory_space<vmem>>, vector<4x384xbf16>
    %cst_11 = arith.constant dense<0.000000e+00> : vector<64x384xf32>
    %14 = tpu.matmul %2, %13, %cst_11 {dimension_numbers = #tpu.dot_dimension_numbers<[1], [0], [0], [1], [0, 0, 1, 1], [], []>} : vector<64x4xbf16>, vector<4x384xbf16>, vector<64x384xf32> -> vector<64x384xf32>
    %15 = arith.addf %12, %14 : vector<64x384xf32>
    %c0_12 = arith.constant 0 : index
    %c0_13 = arith.constant 0 : index
    %16 = vector.load %arg6[%c0_12, %c0_13] : memref<1x384xf32, #tpu.memory_space<vmem>>, vector<1x384xf32>
    %17 = vector.broadcast %16 : vector<1x384xf32> to vector<64x384xf32>
    %18 = arith.addf %15, %17 : vector<64x384xf32>
    %cst_14 = arith.constant 0.000000e+00 : f32
    %19 = vector.broadcast %cst_14 : f32 to vector<64x384xf32>
    %20 = arith.maximumf %18, %19 : vector<64x384xf32>
    %c0_15 = arith.constant 0 : index
    %c0_16 = arith.constant 0 : index
    %21 = vector.load %arg7[%c0_15, %c0_16] : memref<1x384xf32, #tpu.memory_space<vmem>>, vector<1x384xf32>
    %22 = vector.broadcast %21 : vector<1x384xf32> to vector<64x384xf32>
    %23 = arith.mulf %20, %22 : vector<64x384xf32>
    %cst_17 = arith.constant dense<0.000000e+00> : vector<64xf32>
    %24 = vector.multi_reduction <add>, %23, %cst_17 [1] : vector<64x384xf32> to vector<64xf32>
    %25 = vector.shape_cast %24 : vector<64xf32> to vector<64x1xf32>
    %c0_18 = arith.constant 0 : index
    %c0_19 = arith.constant 0 : index
    %26 = vector.load %arg8[%c0_18, %c0_19] : memref<1x1xf32, #tpu.memory_space<vmem>>, vector<1x1xf32>
    %27 = vector.broadcast %26 : vector<1x1xf32> to vector<64x1xf32>
    %28 = arith.addf %25, %27 : vector<64x1xf32>
    %c0_20 = arith.constant 0 : index
    %c0_21 = arith.constant 0 : index
    %29 = vector.load %arg9[%c0_20, %c0_21] : memref<64x1xf32, #tpu.memory_space<vmem>>, vector<64x1xf32>
    tpu.vector_store %arg9[%c0_20, %c0_21], %28 {strides = array<i32>} : memref<64x1xf32, #tpu.memory_space<vmem>>, vector<64x1xf32>,
    return
  }
  func.func @transform_0(%arg0: i32) -> (i32, i32) {
    %c0_i32 = arith.constant 0 : i32
    %c0_i32_0 = arith.constant 0 : i32
    return %arg0, %c0_i32 : i32, i32
  }
  func.func @transform_1(%arg0: i32) -> (i32, i32) {
    %c0_i32 = arith.constant 0 : i32
    %c0_i32_0 = arith.constant 0 : i32
    %c0_i32_1 = arith.constant 0 : i32
    return %c0_i32, %c0_i32_0 : i32, i32
  }
  func.func @transform_2(%arg0: i32) -> (i32, i32) {
    %c0_i32 = arith.constant 0 : i32
    %c0_i32_0 = arith.constant 0 : i32
    %c0_i32_1 = arith.constant 0 : i32
    return %c0_i32, %c0_i32_0 : i32, i32
  }
  func.func @transform_3(%arg0: i32) -> (i32, i32) {
    %c0_i32 = arith.constant 0 : i32
    %c0_i32_0 = arith.constant 0 : i32
    %c0_i32_1 = arith.constant 0 : i32
    return %c0_i32, %c0_i32_0 : i32, i32
  }
  func.func @transform_4(%arg0: i32) -> (i32, i32) {
    %c0_i32 = arith.constant 0 : i32
    %c0_i32_0 = arith.constant 0 : i32
    %c0_i32_1 = arith.constant 0 : i32
    return %c0_i32, %c0_i32_0 : i32, i32
  }
  func.func @transform_5(%arg0: i32) -> (i32, i32) {
    %c0_i32 = arith.constant 0 : i32
    %c0_i32_0 = arith.constant 0 : i32
    %c0_i32_1 = arith.constant 0 : i32
    return %c0_i32, %c0_i32_0 : i32, i32
  }
  func.func @transform_6(%arg0: i32) -> (i32, i32) {
    %c0_i32 = arith.constant 0 : i32
    %c0_i32_0 = arith.constant 0 : i32
    %c0_i32_1 = arith.constant 0 : i32
    return %c0_i32, %c0_i32_0 : i32, i32
  }
  func.func @transform_7(%arg0: i32) -> (i32, i32) {
    %c0_i32 = arith.constant 0 : i32
    %c0_i32_0 = arith.constant 0 : i32
    %c0_i32_1 = arith.constant 0 : i32
    return %c0_i32, %c0_i32_0 : i32, i32
  }
  func.func @transform_8(%arg0: i32) -> (i32, i32) {
    %c0_i32 = arith.constant 0 : i32
    %c0_i32_0 = arith.constant 0 : i32
    return %arg0, %c0_i32 : i32, i32
  }
}

</mosaic_0001>

<llo_original>
// kernel: tpu_custom_call.1
$region0: #{tpu_custom_call.1}
  #allocation0 [shape = 'u32[]', space=smem, size = 0x4, offset = 0x4, fixed_abs, tag = 'smem constant byte address 0x4 - core index']
  #allocation1 [shape = 'u32[72,128]{1,0:T(1,128)}', space=vmem, size = 0x9000, scoped, tag = 'internal scratch']
  #allocation2 [shape = 'f32[1,1]{1,0:T(1,128)S(1)}', space=vmem, size = 0x200, scoped, tag = 'scoped memory for tpu_custom_call.1']
  %s0 = inlined_call_operand.vmem [shape: bf16[64,20], index: 0, kind: input, shape index: {}]
  %s1 = inlined_call_operand.vmem [shape: bf16[16,512], index: 1, kind: input, shape index: {}]
  %s2 = inlined_call_operand.vmem [shape: f32[1,512], index: 2, kind: input, shape index: {}]
  %s3 = inlined_call_operand.hbm [shape: bf16[512,384], index: 3, kind: input, shape index: {}]
  %s4 = inlined_call_operand.vmem [shape: bf16[4,384], index: 4, kind: input, shape index: {}]
  %s5 = inlined_call_operand.vmem [shape: f32[1,384], index: 5, kind: input, shape index: {}]
  %s6 = inlined_call_operand.vmem [shape: f32[1,384], index: 6, kind: input, shape index: {}]
  %s7 = inlined_call_operand.<no memory space> [shape: f32[1,1], index: 7, kind: input, shape index: {}]
  %s8 = inlined_call_operand.vmem [shape: f32[64,1], index: 8, kind: output, shape index: {}]
  %s9 = sld [smem:[#allocation0]]
  $region46: #{tpu_custom_call.1} parent=0
    _
  %s11 = ssub.s32 1, %s9
  %s12 = scalar_select 0, %s11, %s9
  %v13 = vstv %s7
  %14 = vst [vmem:[#allocation2] sm:$0x1] %v13
  $region1: #{tpu_custom_call.1} parent=0
    #allocation3 [shape = 'u8[393216]{0}', space=vmem, size = 0x60000, scoped, tag = 'input window, operand 3, single buffered']
    #allocation4 [shape = 's32[1]{0}', space=sflag, size = 0x4, scoped, tag = 'scoped memory for tpu_custom_call.1']
    %15 = vsyncpa [#allocation4], 0
    // Predicated region
    $region2: #{tpu_custom_call.1} parent=1 // pred_check
      _
    $region3: #{tpu_custom_call.1} parent=1 // pred_check_branch
      %17 = sbr.rel (0) target = $region5
    $region4: #{tpu_custom_call.1} parent=1 // pred_region
      _
    $region5: #{tpu_custom_call.1} parent=1 // pred_fallthru
      _
    // Predicated region
    $region6: #{tpu_custom_call.1} parent=1 // pred_check
      _
    $region7: #{tpu_custom_call.1} parent=1 // pred_check_branch
      %19 = sbr.rel (0) target = $region9
    $region8: #{tpu_custom_call.1} parent=1 // pred_region
      _
    $region9: #{tpu_custom_call.1} parent=1 // pred_fallthru
      _
    // Predicated region
    $region10: #{tpu_custom_call.1} parent=1 // pred_check
      _
    $region11: #{tpu_custom_call.1} parent=1 // pred_check_branch
      %21 = sbr.rel (0) target = $region13
    $region12: #{tpu_custom_call.1} parent=1 // pred_region
      _
    $region13: #{tpu_custom_call.1} parent=1 // pred_fallthru
      _
    // Predicated region
    $region14: #{tpu_custom_call.1} parent=1 // pred_check
      _
    $region15: #{tpu_custom_call.1} parent=1 // pred_check_branch
      %23 = sbr.rel (0) target = $region17
    $region16: #{tpu_custom_call.1} parent=1 // pred_region
      %25 = vsyncadd [#allocation4], 0
      %s26 = sshll.u32 %s3, 4
      %s27 = int_to_ptr.hbm [resolvable:$true] %s26
      %s28 = sshll.u32 [#allocation3], 4
      %s29 = int_to_ptr.vmem [resolvable:$true] %s28
      %34 = dma.hbm_to_vmem [thread:$0]  %s27, 12288, %s29, [#allocation4], 192, 192, 12
    $region17: #{tpu_custom_call.1} parent=1 // pred_fallthru
      _
    // Predicated region
    $region18: #{tpu_custom_call.1} parent=1 // pred_check
      _
    $region19: #{tpu_custom_call.1} parent=1 // pred_check_branch
      %36 = sbr.rel (0) target = $region21
    $region20: #{tpu_custom_call.1} parent=1 // pred_region
      _
    $region21: #{tpu_custom_call.1} parent=1 // pred_fallthru
      _
    // Predicated region
    $region22: #{tpu_custom_call.1} parent=1 // pred_check
      _
    $region23: #{tpu_custom_call.1} parent=1 // pred_check_branch
      %38 = sbr.rel (0) target = $region25
    $region24: #{tpu_custom_call.1} parent=1 // pred_region
      _
    $region25: #{tpu_custom_call.1} parent=1 // pred_fallthru
      _
    // Predicated region
    $region26: #{tpu_custom_call.1} parent=1 // pred_check
      _
    $region27: #{tpu_custom_call.1} parent=1 // pred_check_branch
      %40 = sbr.rel (0) target = $region29
    $region28: #{tpu_custom_call.1} parent=1 // pred_region
      _
    $region29: #{tpu_custom_call.1} parent=1 // pred_fallthru
      _
    // Predicated region
    $region30: #{tpu_custom_call.1} parent=1 // pred_check
      _
    $region31: #{tpu_custom_call.1} parent=1 // pred_check_branch
      %42 = sbr.rel (0) target = $region33
    $region32: #{tpu_custom_call.1} parent=1 // pred_region
      _
    $region33: #{tpu_custom_call.1} parent=1 // pred_fallthru
      _
    // Predicated region
    $region34: #{tpu_custom_call.1} parent=1 // pred_check
      _
    $region35: #{tpu_custom_call.1} parent=1 // pred_check_branch
      %44 = sbr.rel (0) target = $region37
    $region36: #{tpu_custom_call.1} parent=1 // pred_region
      %46 = dma.done [#allocation4], 12288
    $region37: #{tpu_custom_call.1} parent=1 // pred_fallthru
      _
    %v48 = vld [vmem:[%s0] sm:$0xf]
    %v49 = vld [vmem:[%s0 + $0x4] sm:$0xf]
    %v50 = vld [vmem:[%s0 + $0x8] sm:$0xf]
    %v51 = vld [vmem:[%s0 + $0xc] sm:$0xf]
    %v52 = vld [vmem:[%s0 + $0x10] sm:$0xf]
    %v53 = vld [vmem:[%s0 + $0x14] sm:$0xf]
    %v54 = vld [vmem:[%s0 + $0x18] sm:$0xf]
    %v55 = vld [vmem:[%s0 + $0x1c] sm:$0xf]
    %v56 = vld [vmem:[%s1] sm:$0xff]
    %v57 = vld [vmem:[%s1 + $0x8] sm:$0xff]
    %v58 = vld [vmem:[%s1 + $0x10] sm:$0xff]
    %v59 = vld [vmem:[%s1 + $0x18] sm:$0xff]
    %v60 = vld [vmem:[%s2] sm:$0xf]
    %v62 = vperm.slane %v60, 0
    %v63 = vperm.slane %v60, 1
    %v64 = vperm.slane %v60, 2
    %v65 = vperm.slane %v60, 3
    %v78 = vunpack.c.l.b16 %v48
    %v79 = vunpack.c.l.b16 %v49
    %v80 = vunpack.c.l.b16 %v50
    %v81 = vunpack.c.l.b16 %v51
    %v82 = vunpack.c.l.b16 %v52
    %v83 = vunpack.c.l.b16 %v53
    %v84 = vunpack.c.l.b16 %v54
    %v85 = vunpack.c.l.b16 %v55
    %v86 = vpack.c.b16 %v79, %v78
    %v87 = vpack.c.b16 %v81, %v80
    %v88 = vpack.c.b16 %v83, %v82
    %v89 = vpack.c.b16 %v85, %v84
    %v94 = vunpack.c.l.b16 %v56
    %v95 = vunpack.c.h.b16 %v56
    %v96 = vunpack.c.l.b16 %v57
    %v97 = vunpack.c.h.b16 %v57
    %v98 = vunpack.c.l.b16 %v58
    %v99 = vunpack.c.h.b16 %v58
    %v100 = vunpack.c.l.b16 %v59
    %v101 = vunpack.c.h.b16 %v59
    %v102 = vpack.c.b16 %v98, %v94
    %v103 = vpack.c.b16 %v99, %v95
    %v104 = vpack.c.b16 %v100, %v96
    %v105 = vpack.c.b16 %v101, %v97
    %vm110 = vcmask 130048
    %v112 = vsel %vm110, %v86, 0
    %v115 = vsel %vm110, %v87, 0
    %v118 = vsel %vm110, %v88, 0
    %v121 = vsel %vm110, %v89, 0
    %123 = vmatpush.bf16.msra.mxu0 0
    %124 = vmatpush.bf16.msra.mxu0 0
    %125 = vmatpush.bf16.msra.mxu0 0
    %126 = vmatpush.bf16.msra.mxu0 0
    %127 = vmatpush.bf16.msra.mxu0 0
    %128 = vmatpush.bf16.msra.mxu0 0
    %129 = vmatpush.bf16.msra.mxu0 0
    %130 = vmatpush.bf16.msra.mxu0 %v102
    %131 = vmatmul.bf16.gmra.mxu0 %v112
    %v132 = vpop.f32.mrf.mxu0
    %v133 = vadd.f32 %v62, %v132
    %v134 = vpop.f32.mrf.mxu0
    %v135 = vadd.f32 %v62, %v134
    %136 = vmatmul.bf16.gmra.mxu0 %v115
    %v137 = vpop.f32.mrf.mxu0
    %v138 = vadd.f32 %v62, %v137
    %v139 = vpop.f32.mrf.mxu0
    %v140 = vadd.f32 %v62, %v139
    %141 = vmatmul.bf16.gmra.mxu0 %v118
    %v142 = vpop.f32.mrf.mxu0
    %v143 = vadd.f32 %v62, %v142
    %v144 = vpop.f32.mrf.mxu0
    %v145 = vadd.f32 %v62, %v144
    %146 = vmatmul.bf16.gmra.mxu0 %v121
    %v147 = vpop.f32.mrf.mxu0
    %v148 = vadd.f32 %v62, %v147
    %v149 = vpop.f32.mrf.mxu0
    %v150 = vadd.f32 %v62, %v149
    %151 = vdwg.mxu0
    %152 = vmatpush.bf16.msra.mxu0 0
    %153 = vmatpush.bf16.msra.mxu0 0
    %154 = vmatpush.bf16.msra.mxu0 0
    %155 = vmatpush.bf16.msra.mxu0 0
    %156 = vmatpush.bf16.msra.mxu0 0
    %157 = vmatpush.bf16.msra.mxu0 0
    %158 = vmatpush.bf16.msra.mxu0 0
    %159 = vmatpush.bf16.msra.mxu0 %v103
    %160 = vmatmul.bf16.gmra.mxu0 %v112
    %v161 = vpop.f32.mrf.mxu0
    %v162 = vadd.f32 %v63, %v161
    %v163 = vpop.f32.mrf.mxu0
    %v164 = vadd.f32 %v63, %v163
    %165 = vmatmul.bf16.gmra.mxu0 %v115
    %v166 = vpop.f32.mrf.mxu0
    %v167 = vadd.f32 %v63, %v166
    %v168 = vpop.f32.mrf.mxu0
    %v169 = vadd.f32 %v63, %v168
    %170 = vmatmul.bf16.gmra.mxu0 %v118
    %v171 = vpop.f32.mrf.mxu0
    %v172 = vadd.f32 %v63, %v171
    %v173 = vpop.f32.mrf.mxu0
    %v174 = vadd.f32 %v63, %v173
    %175 = vmatmul.bf16.gmra.mxu0 %v121
    %v176 = vpop.f32.mrf.mxu0
    %v177 = vadd.f32 %v63, %v176
    %v178 = vpop.f32.mrf.mxu0
    %v179 = vadd.f32 %v63, %v178
    %180 = vdwg.mxu0
    %181 = vmatpush.bf16.msra.mxu0 0
    %182 = vmatpush.bf16.msra.mxu0 0
    %183 = vmatpush.bf16.msra.mxu0 0
    %184 = vmatpush.bf16.msra.mxu0 0
    %185 = vmatpush.bf16.msra.mxu0 0
    %186 = vmatpush.bf16.msra.mxu0 0
    %187 = vmatpush.bf16.msra.mxu0 0
    %188 = vmatpush.bf16.msra.mxu0 %v104
    %189 = vmatmul.bf16.gmra.mxu0 %v112
    %v190 = vpop.f32.mrf.mxu0
    %v191 = vadd.f32 %v64, %v190
    %v192 = vpop.f32.mrf.mxu0
    %v193 = vadd.f32 %v64, %v192
    %194 = vmatmul.bf16.gmra.mxu0 %v115
    %v195 = vpop.f32.mrf.mxu0
    %v196 = vadd.f32 %v64, %v195
    %v197 = vpop.f32.mrf.mxu0
    %v198 = vadd.f32 %v64, %v197
    %199 = vmatmul.bf16.gmra.mxu0 %v118
    %v200 = vpop.f32.mrf.mxu0
    %v201 = vadd.f32 %v64, %v200
    %v202 = vpop.f32.mrf.mxu0
    %v203 = vadd.f32 %v64, %v202
    %204 = vmatmul.bf16.gmra.mxu0 %v121
    %v205 = vpop.f32.mrf.mxu0
    %v206 = vadd.f32 %v64, %v205
    %v207 = vpop.f32.mrf.mxu0
    %v208 = vadd.f32 %v64, %v207
    %209 = vdwg.mxu0
    %210 = vmatpush.bf16.msra.mxu0 0
    %211 = vmatpush.bf16.msra.mxu0 0
    %212 = vmatpush.bf16.msra.mxu0 0
    %213 = vmatpush.bf16.msra.mxu0 0
    %214 = vmatpush.bf16.msra.mxu0 0
    %215 = vmatpush.bf16.msra.mxu0 0
    %216 = vmatpush.bf16.msra.mxu0 0
    %217 = vmatpush.bf16.msra.mxu0 %v105
    %218 = vmatmul.bf16.gmra.mxu0 %v112
    %v219 = vpop.f32.mrf.mxu0
    %v220 = vadd.f32 %v65, %v219
    %v221 = vpop.f32.mrf.mxu0
    %v222 = vadd.f32 %v65, %v221
    %223 = vmatmul.bf16.gmra.mxu0 %v115
    %v224 = vpop.f32.mrf.mxu0
    %v225 = vadd.f32 %v65, %v224
    %v226 = vpop.f32.mrf.mxu0
    %v227 = vadd.f32 %v65, %v226
    %228 = vmatmul.bf16.gmra.mxu0 %v118
    %v229 = vpop.f32.mrf.mxu0
    %v230 = vadd.f32 %v65, %v229
    %v231 = vpop.f32.mrf.mxu0
    %v232 = vadd.f32 %v65, %v231
    %233 = vmatmul.bf16.gmra.mxu0 %v121
    %v234 = vpop.f32.mrf.mxu0
    %v235 = vadd.f32 %v65, %v234
    %v236 = vpop.f32.mrf.mxu0
    %v237 = vadd.f32 %v65, %v236
    %238 = vdwg.mxu0
    %v239 = vmax.f32 %v133, 0.0
    %v240 = vmax.f32 %v162, 0.0
    %v241 = vmax.f32 %v191, 0.0
    %v242 = vmax.f32 %v220, 0.0
    %v243 = vmax.f32 %v135, 0.0
    %v244 = vmax.f32 %v164, 0.0
    %v245 = vmax.f32 %v193, 0.0
    %v246 = vmax.f32 %v222, 0.0
    %v247 = vmax.f32 %v138, 0.0
    %v248 = vmax.f32 %v167, 0.0
    %v249 = vmax.f32 %v196, 0.0
    %v250 = vmax.f32 %v225, 0.0
    %v251 = vmax.f32 %v140, 0.0
    %v252 = vmax.f32 %v169, 0.0
    %v253 = vmax.f32 %v198, 0.0
    %v254 = vmax.f32 %v227, 0.0
    %v255 = vmax.f32 %v143, 0.0
    %v256 = vmax.f32 %v172, 0.0
    %v257 = vmax.f32 %v201, 0.0
    %v258 = vmax.f32 %v230, 0.0
    %v259 = vmax.f32 %v145, 0.0
    %v260 = vmax.f32 %v174, 0.0
    %v261 = vmax.f32 %v203, 0.0
    %v262 = vmax.f32 %v232, 0.0
    %v263 = vmax.f32 %v148, 0.0
    %v264 = vmax.f32 %v177, 0.0
    %v265 = vmax.f32 %v206, 0.0
    %v266 = vmax.f32 %v235, 0.0
    %v267 = vmax.f32 %v150, 0.0
    %v268 = vmax.f32 %v179, 0.0
    %v269 = vmax.f32 %v208, 0.0
    %v270 = vmax.f32 %v237, 0.0
    %v271 = vpack.c.bf16 %v243, %v239
    %v272 = vpack.c.bf16 %v244, %v240
    %v273 = vpack.c.bf16 %v245, %v241
    %v274 = vpack.c.bf16 %v246, %v242
    %v275 = vpack.c.bf16 %v251, %v247
    %v276 = vpack.c.bf16 %v252, %v248
    %v277 = vpack.c.bf16 %v253, %v249
    %v278 = vpack.c.bf16 %v254, %v250
    %v279 = vpack.c.bf16 %v259, %v255
    %v280 = vpack.c.bf16 %v260, %v256
    %v281 = vpack.c.bf16 %v261, %v257
    %v282 = vpack.c.bf16 %v262, %v258
    %v283 = vpack.c.bf16 %v267, %v263
    %v284 = vpack.c.bf16 %v268, %v264
    %v285 = vpack.c.bf16 %v269, %v265
    %v286 = vpack.c.bf16 %v270, %v266
    %v287 = vld [vmem:[#allocation3] sm:$0xff]
    %v288 = vld [vmem:[#allocation3 + $0x8] sm:$0xf]
    %v289 = vld [vmem:[#allocation3 + $0xc] sm:$0xff]
    %v290 = vld [vmem:[#allocation3 + $0x14] sm:$0xf]
    %v291 = vld [vmem:[#allocation3 + $0x18] sm:$0xff]
    %v292 = vld [vmem:[#allocation3 + $0x20] sm:$0xf]
    %v293 = vld [vmem:[#allocation3 + $0x24] sm:$0xff]
    %v294 = vld [vmem:[#allocation3 + $0x2c] sm:$0xf]
    %v295 = vld [vmem:[#allocation3 + $0x30] sm:$0xff]
    %v296 = vld [vmem:[#allocation3 + $0x38] sm:$0xf]
    %v297 = vld [vmem:[#allocation3 + $0x3c] sm:$0xff]
    %v298 = vld [vmem:[#allocation3 + $0x44] sm:$0xf]
    %v299 = vld [vmem:[#allocation3 + $0x48] sm:$0xff]
    %v300 = vld [vmem:[#allocation3 + $0x50] sm:$0xf]
    %v301 = vld [vmem:[#allocation3 + $0x54] sm:$0xff]
    %v302 = vld [vmem:[#allocation3 + $0x5c] sm:$0xf]
    %v303 = vld [vmem:[#allocation3 + $0x60] sm:$0xff]
    %v304 = vld [vmem:[#allocation3 + $0x68] sm:$0xf]
    %v305 = vld [vmem:[#allocation3 + $0x6c] sm:$0xff]
    %v306 = vld [vmem:[#allocation3 + $0x74] sm:$0xf]
    %v307 = vld [vmem:[#allocation3 + $0x78] sm:$0xff]
    %v308 = vld [vmem:[#allocation3 + $0x80] sm:$0xf]
    %v309 = vld [vmem:[#allocation3 + $0x84] sm:$0xff]
    %v310 = vld [vmem:[#allocation3 + $0x8c] sm:$0xf]
    %v311 = vld [vmem:[#allocation3 + $0x90] sm:$0xff]
    %v312 = vld [vmem:[#allocation3 + $0x98] sm:$0xf]
    %v313 = vld [vmem:[#allocation3 + $0x9c] sm:$0xff]
    %v314 = vld [vmem:[#allocation3 + $0xa4] sm:$0xf]
    %v315 = vld [vmem:[#allocation3 + $0xa8] sm:$0xff]
    %v316 = vld [vmem:[#allocation3 + $0xb0] sm:$0xf]
    %v317 = vld [vmem:[#allocation3 + $0xb4] sm:$0xff]
    %v318 = vld [vmem:[#allocation3 + $0xbc] sm:$0xf]
    %v319 = vld [vmem:[#allocation3 + $0xc0] sm:$0xff]
    %v320 = vld [vmem:[#allocation3 + $0xc8] sm:$0xf]
    %v321 = vld [vmem:[#allocation3 + $0xcc] sm:$0xff]
    %v322 = vld [vmem:[#allocation3 + $0xd4] sm:$0xf]
    %v323 = vld [vmem:[#allocation3 + $0xd8] sm:$0xff]
    %v324 = vld [vmem:[#allocation3 + $0xe0] sm:$0xf]
    %v325 = vld [vmem:[#allocation3 + $0xe4] sm:$0xff]
    %v326 = vld [vmem:[#allocation3 + $0xec] sm:$0xf]
    %v327 = vld [vmem:[#allocation3 + $0xf0] sm:$0xff]
    %v328 = vld [vmem:[#allocation3 + $0xf8] sm:$0xf]
    %v329 = vld [vmem:[#allocation3 + $0xfc] sm:$0xff]
    %v330 = vld [vmem:[#allocation3 + $0x104] sm:$0xf]
    %v331 = vld [vmem:[#allocation3 + $0x108] sm:$0xff]
    %v332 = vld [vmem:[#allocation3 + $0x110] sm:$0xf]
    %v333 = vld [vmem:[#allocation3 + $0x114] sm:$0xff]
    %v334 = vld [vmem:[#allocation3 + $0x11c] sm:$0xf]
    %v335 = vld [vmem:[#allocation3 + $0x120] sm:$0xff]
    %v336 = vld [vmem:[#allocation3 + $0x128] sm:$0xf]
    %v337 = vld [vmem:[#allocation3 + $0x12c] sm:$0xff]
    %v338 = vld [vmem:[#allocation3 + $0x134] sm:$0xf]
    %v339 = vld [vmem:[#allocation3 + $0x138] sm:$0xff]
    %v340 = vld [vmem:[#allocation3 + $0x140] sm:$0xf]
    %v341 = vld [vmem:[#allocation3 + $0x144] sm:$0xff]
    %v342 = vld [vmem:[#allocation3 + $0x14c] sm:$0xf]
    %v343 = vld [vmem:[#allocation3 + $0x150] sm:$0xff]
    %v344 = vld [vmem:[#allocation3 + $0x158] sm:$0xf]
    %v345 = vld [vmem:[#allocation3 + $0x15c] sm:$0xff]
    %v346 = vld [vmem:[#allocation3 + $0x164] sm:$0xf]
    %v347 = vld [vmem:[#allocation3 + $0x168] sm:$0xff]
    %v348 = vld [vmem:[#allocation3 + $0x170] sm:$0xf]
    %v349 = vld [vmem:[#allocation3 + $0x174] sm:$0xff]
    %v350 = vld [vmem:[#allocation3 + $0x17c] sm:$0xf]
    %v351 = vld [vmem:[#allocation3 + $0x180] sm:$0xff]
    %v352 = vld [vmem:[#allocation3 + $0x188] sm:$0xf]
    %v353 = vld [vmem:[#allocation3 + $0x18c] sm:$0xff]
    %v354 = vld [vmem:[#allocation3 + $0x194] sm:$0xf]
    %v355 = vld [vmem:[#allocation3 + $0x198] sm:$0xff]
    %v356 = vld [vmem:[#allocation3 + $0x1a0] sm:$0xf]
    %v357 = vld [vmem:[#allocation3 + $0x1a4] sm:$0xff]
    %v358 = vld [vmem:[#allocation3 + $0x1ac] sm:$0xf]
    %v359 = vld [vmem:[#allocation3 + $0x1b0] sm:$0xff]
    %v360 = vld [vmem:[#allocation3 + $0x1b8] sm:$0xf]
    %v361 = vld [vmem:[#allocation3 + $0x1bc] sm:$0xff]
    %v362 = vld [vmem:[#allocation3 + $0x1c4] sm:$0xf]
    %v363 = vld [vmem:[#allocation3 + $0x1c8] sm:$0xff]
    %v364 = vld [vmem:[#allocation3 + $0x1d0] sm:$0xf]
    %v365 = vld [vmem:[#allocation3 + $0x1d4] sm:$0xff]
    %v366 = vld [vmem:[#allocation3 + $0x1dc] sm:$0xf]
    %v367 = vld [vmem:[#allocation3 + $0x1e0] sm:$0xff]
    %v368 = vld [vmem:[#allocation3 + $0x1e8] sm:$0xf]
    %v369 = vld [vmem:[#allocation3 + $0x1ec] sm:$0xff]
    %v370 = vld [vmem:[#allocation3 + $0x1f4] sm:$0xf]
    %v371 = vld [vmem:[#allocation3 + $0x1f8] sm:$0xff]
    %v372 = vld [vmem:[#allocation3 + $0x200] sm:$0xf]
    %v373 = vld [vmem:[#allocation3 + $0x204] sm:$0xff]
    %v374 = vld [vmem:[#allocation3 + $0x20c] sm:$0xf]
    %v375 = vld [vmem:[#allocation3 + $0x210] sm:$0xff]
    %v376 = vld [vmem:[#allocation3 + $0x218] sm:$0xf]
    %v377 = vld [vmem:[#allocation3 + $0x21c] sm:$0xff]
    %v378 = vld [vmem:[#allocation3 + $0x224] sm:$0xf]
    %v379 = vld [vmem:[#allocation3 + $0x228] sm:$0xff]
    %v380 = vld [vmem:[#allocation3 + $0x230] sm:$0xf]
    %v381 = vld [vmem:[#allocation3 + $0x234] sm:$0xff]
    %v382 = vld [vmem:[#allocation3 + $0x23c] sm:$0xf]
    %v383 = vld [vmem:[#allocation3 + $0x240] sm:$0xff]
    %v384 = vld [vmem:[#allocation3 + $0x248] sm:$0xf]
    %v385 = vld [vmem:[#allocation3 + $0x24c] sm:$0xff]
    %v386 = vld [vmem:[#allocation3 + $0x254] sm:$0xf]
    %v387 = vld [vmem:[#allocation3 + $0x258] sm:$0xff]
    %v388 = vld [vmem:[#allocation3 + $0x260] sm:$0xf]
    %v389 = vld [vmem:[#allocation3 + $0x264] sm:$0xff]
    %v390 = vld [vmem:[#allocation3 + $0x26c] sm:$0xf]
    %v391 = vld [vmem:[#allocation3 + $0x270] sm:$0xff]
    %v392 = vld [vmem:[#allocation3 + $0x278] sm:$0xf]
    %v393 = vld [vmem:[#allocation3 + $0x27c] sm:$0xff]
    %v394 = vld [vmem:[#allocation3 + $0x284] sm:$0xf]
    %v395 = vld [vmem:[#allocation3 + $0x288] sm:$0xff]
    %v396 = vld [vmem:[#allocation3 + $0x290] sm:$0xf]
    %v397 = vld [vmem:[#allocation3 + $0x294] sm:$0xff]
    %v398 = vld [vmem:[#allocation3 + $0x29c] sm:$0xf]
    %v399 = vld [vmem:[#allocation3 + $0x2a0] sm:$0xff]
    %v400 = vld [vmem:[#allocation3 + $0x2a8] sm:$0xf]
    %v401 = vld [vmem:[#allocation3 + $0x2ac] sm:$0xff]
    %v402 = vld [vmem:[#allocation3 + $0x2b4] sm:$0xf]
    %v403 = vld [vmem:[#allocation3 + $0x2b8] sm:$0xff]
    %v404 = vld [vmem:[#allocation3 + $0x2c0] sm:$0xf]
    %v405 = vld [vmem:[#allocation3 + $0x2c4] sm:$0xff]
    %v406 = vld [vmem:[#allocation3 + $0x2cc] sm:$0xf]
    %v407 = vld [vmem:[#allocation3 + $0x2d0] sm:$0xff]
    %v408 = vld [vmem:[#allocation3 + $0x2d8] sm:$0xf]
    %v409 = vld [vmem:[#allocation3 + $0x2dc] sm:$0xff]
    %v410 = vld [vmem:[#allocation3 + $0x2e4] sm:$0xf]
    %v411 = vld [vmem:[#allocation3 + $0x2e8] sm:$0xff]
    %v412 = vld [vmem:[#allocation3 + $0x2f0] sm:$0xf]
    %v413 = vld [vmem:[#allocation3 + $0x2f4] sm:$0xff]
    %v414 = vld [vmem:[#allocation3 + $0x2fc] sm:$0xf]
    %v415 = vld [vmem:[%s4] sm:$0x3f]
    %416 = vrot.lane.b32.xlu0 %v86, 112
    %v417 = vpop.permute.xlu0 %416
    %418 = vrot.lane.b32.xlu0 %v87, 112
    %v419 = vpop.permute.xlu0 %418
    %420 = vrot.lane.b32.xlu0 %v88, 112
    %v421 = vpop.permute.xlu0 %420
    %422 = vrot.lane.b32.xlu0 %v89, 112
    %v423 = vpop.permute.xlu0 %422
    %425 = vst [vmem:[#allocation1] ss:$4 sm:$0xff] %v415
    %v426 = vld.sshfl [vmem:[#allocation1] sm:$0xff pattern:$0x73625140]
    %v427 = vld.sshfl [vmem:[#allocation1 + $0x8] sm:$0xff pattern:$0x73625140]
    %v428 = vld.sshfl [vmem:[#allocation1 + $0x10] sm:$0xff pattern:$0x73625140]
    %vm429 = vcmask 31744
    %v431 = vsel %vm429, %v417, 0
    %v434 = vsel %vm429, %v419, 0
    %v437 = vsel %vm429, %v421, 0
    %v440 = vsel %vm429, %v423, 0
    %vm442 = vcmask 1041408
    %v443 = vsel %vm442, %v426, 0
    %v445 = vsel %vm442, %v427, 0
    %v447 = vsel %vm442, %v428, 0
    %449 = vmatpush.bf16.msra.mxu0 0
    %450 = vmatpush.bf16.msra.mxu0 0
    %451 = vmatpush.bf16.msra.mxu0 0
    %452 = vmatpush.bf16.msra.mxu0 0
    %453 = vmatpush.bf16.msra.mxu0 0
    %454 = vmatpush.bf16.msra.mxu0 0
    %455 = vmatpush.bf16.msra.mxu0 0
    %456 = vmatpush.bf16.msra.mxu0 %v443
    %457 = vmatmul.bf16.gmra.mxu0 %v431
    %v458 = vpop.f32.mrf.mxu0
    %v459 = vadd.f32 0.0, %v458
    %v460 = vpop.f32.mrf.mxu0
    %v461 = vadd.f32 0.0, %v460
    %462 = vmatmul.bf16.gmra.mxu0 %v434
    %v463 = vpop.f32.mrf.mxu0
    %v464 = vadd.f32 0.0, %v463
    %v465 = vpop.f32.mrf.mxu0
    %v466 = vadd.f32 0.0, %v465
    %467 = vmatmul.bf16.gmra.mxu0 %v437
    %v468 = vpop.f32.mrf.mxu0
    %v469 = vadd.f32 0.0, %v468
    %v470 = vpop.f32.mrf.mxu0
    %v471 = vadd.f32 0.0, %v470
    %472 = vmatmul.bf16.gmra.mxu0 %v440
    %v473 = vpop.f32.mrf.mxu0
    %v474 = vadd.f32 0.0, %v473
    %v475 = vpop.f32.mrf.mxu0
    %v476 = vadd.f32 0.0, %v475
    %477 = vdwg.mxu0
    %478 = vmatpush.bf16.msra.mxu0 0
    %479 = vmatpush.bf16.msra.mxu0 0
    %480 = vmatpush.bf16.msra.mxu0 0
    %481 = vmatpush.bf16.msra.mxu0 0
    %482 = vmatpush.bf16.msra.mxu0 0
    %483 = vmatpush.bf16.msra.mxu0 0
    %484 = vmatpush.bf16.msra.mxu0 0
    %485 = vmatpush.bf16.msra.mxu0 %v445
    %486 = vmatmul.bf16.gmra.mxu0 %v431
    %v487 = vpop.f32.mrf.mxu0
    %v488 = vadd.f32 0.0, %v487
    %v489 = vpop.f32.mrf.mxu0
    %v490 = vadd.f32 0.0, %v489
    %491 = vmatmul.bf16.gmra.mxu0 %v434
    %v492 = vpop.f32.mrf.mxu0
    %v493 = vadd.f32 0.0, %v492
    %v494 = vpop.f32.mrf.mxu0
    %v495 = vadd.f32 0.0, %v494
    %496 = vmatmul.bf16.gmra.mxu0 %v437
    %v497 = vpop.f32.mrf.mxu0
    %v498 = vadd.f32 0.0, %v497
    %v499 = vpop.f32.mrf.mxu0
    %v500 = vadd.f32 0.0, %v499
    %501 = vmatmul.bf16.gmra.mxu0 %v440
    %v502 = vpop.f32.mrf.mxu0
    %v503 = vadd.f32 0.0, %v502
    %v504 = vpop.f32.mrf.mxu0
    %v505 = vadd.f32 0.0, %v504
    %506 = vdwg.mxu0
    %507 = vmatpush.bf16.msra.mxu0 0
    %508 = vmatpush.bf16.msra.mxu0 0
    %509 = vmatpush.bf16.msra.mxu0 0
    %510 = vmatpush.bf16.msra.mxu0 0
    %511 = vmatpush.bf16.msra.mxu0 0
    %512 = vmatpush.bf16.msra.mxu0 0
    %513 = vmatpush.bf16.msra.mxu0 0
    %514 = vmatpush.bf16.msra.mxu0 %v447
    %515 = vmatmul.bf16.gmra.mxu0 %v431
    %v516 = vpop.f32.mrf.mxu0
    %v517 = vadd.f32 0.0, %v516
    %v518 = vpop.f32.mrf.mxu0
    %v519 = vadd.f32 0.0, %v518
    %520 = vmatmul.bf16.gmra.mxu0 %v434
    %v521 = vpop.f32.mrf.mxu0
    %v522 = vadd.f32 0.0, %v521
    %v523 = vpop.f32.mrf.mxu0
    %v524 = vadd.f32 0.0, %v523
    %525 = vmatmul.bf16.gmra.mxu0 %v437
    %v526 = vpop.f32.mrf.mxu0
    %v527 = vadd.f32 0.0, %v526
    %v528 = vpop.f32.mrf.mxu0
    %v529 = vadd.f32 0.0, %v528
    %530 = vmatmul.bf16.gmra.mxu0 %v440
    %v531 = vpop.f32.mrf.mxu0
    %v532 = vadd.f32 0.0, %v531
    %v533 = vpop.f32.mrf.mxu0
    %v534 = vadd.f32 0.0, %v533
    %535 = vdwg.mxu0
    %v664 = vunpack.c.l.b16 %v287
    %v665 = vunpack.c.h.b16 %v287
    %v666 = vunpack.c.l.b16 %v288
    %v667 = vunpack.c.l.b16 %v289
    %v668 = vunpack.c.h.b16 %v289
    %v669 = vunpack.c.l.b16 %v290
    %v670 = vunpack.c.l.b16 %v291
    %v671 = vunpack.c.h.b16 %v291
    %v672 = vunpack.c.l.b16 %v292
    %v673 = vunpack.c.l.b16 %v293
    %v674 = vunpack.c.h.b16 %v293
    %v675 = vunpack.c.l.b16 %v294
    %v676 = vunpack.c.l.b16 %v295
    %v677 = vunpack.c.h.b16 %v295
    %v678 = vunpack.c.l.b16 %v296
    %v679 = vunpack.c.l.b16 %v297
    %v680 = vunpack.c.h.b16 %v297
    %v681 = vunpack.c.l.b16 %v298
    %v682 = vunpack.c.l.b16 %v299
    %v683 = vunpack.c.h.b16 %v299
    %v684 = vunpack.c.l.b16 %v300
    %v685 = vunpack.c.l.b16 %v301
    %v686 = vunpack.c.h.b16 %v301
    %v687 = vunpack.c.l.b16 %v302
    %v688 = vunpack.c.l.b16 %v303
    %v689 = vunpack.c.h.b16 %v303
    %v690 = vunpack.c.l.b16 %v304
    %v691 = vunpack.c.l.b16 %v305
    %v692 = vunpack.c.h.b16 %v305
    %v693 = vunpack.c.l.b16 %v306
    %v694 = vunpack.c.l.b16 %v307
    %v695 = vunpack.c.h.b16 %v307
    %v696 = vunpack.c.l.b16 %v308
    %v697 = vunpack.c.l.b16 %v309
    %v698 = vunpack.c.h.b16 %v309
    %v699 = vunpack.c.l.b16 %v310
    %v700 = vunpack.c.l.b16 %v311
    %v701 = vunpack.c.h.b16 %v311
    %v702 = vunpack.c.l.b16 %v312
    %v703 = vunpack.c.l.b16 %v313
    %v704 = vunpack.c.h.b16 %v313
    %v705 = vunpack.c.l.b16 %v314
    %v706 = vunpack.c.l.b16 %v315
    %v707 = vunpack.c.h.b16 %v315
    %v708 = vunpack.c.l.b16 %v316
    %v709 = vunpack.c.l.b16 %v317
    %v710 = vunpack.c.h.b16 %v317
    %v711 = vunpack.c.l.b16 %v318
    %v712 = vunpack.c.l.b16 %v319
    %v713 = vunpack.c.h.b16 %v319
    %v714 = vunpack.c.l.b16 %v320
    %v715 = vunpack.c.l.b16 %v321
    %v716 = vunpack.c.h.b16 %v321
    %v717 = vunpack.c.l.b16 %v322
    %v718 = vunpack.c.l.b16 %v323
    %v719 = vunpack.c.h.b16 %v323
    %v720 = vunpack.c.l.b16 %v324
    %v721 = vunpack.c.l.b16 %v325
    %v722 = vunpack.c.h.b16 %v325
    %v723 = vunpack.c.l.b16 %v326
    %v724 = vunpack.c.l.b16 %v327
    %v725 = vunpack.c.h.b16 %v327
    %v726 = vunpack.c.l.b16 %v328
    %v727 = vunpack.c.l.b16 %v329
    %v728 = vunpack.c.h.b16 %v329
    %v729 = vunpack.c.l.b16 %v330
    %v730 = vunpack.c.l.b16 %v331
    %v731 = vunpack.c.h.b16 %v331
    %v732 = vunpack.c.l.b16 %v332
    %v733 = vunpack.c.l.b16 %v333
    %v734 = vunpack.c.h.b16 %v333
    %v735 = vunpack.c.l.b16 %v334
    %v736 = vunpack.c.l.b16 %v335
    %v737 = vunpack.c.h.b16 %v335
    %v738 = vunpack.c.l.b16 %v336
    %v739 = vunpack.c.l.b16 %v337
    %v740 = vunpack.c.h.b16 %v337
    %v741 = vunpack.c.l.b16 %v338
    %v742 = vunpack.c.l.b16 %v339
    %v743 = vunpack.c.h.b16 %v339
    %v744 = vunpack.c.l.b16 %v340
    %v745 = vunpack.c.l.b16 %v341
    %v746 = vunpack.c.h.b16 %v341
    %v747 = vunpack.c.l.b16 %v342
    %v748 = vunpack.c.l.b16 %v343
    %v749 = vunpack.c.h.b16 %v343
    %v750 = vunpack.c.l.b16 %v344
    %v751 = vunpack.c.l.b16 %v345
    %v752 = vunpack.c.h.b16 %v345
    %v753 = vunpack.c.l.b16 %v346
    %v754 = vunpack.c.l.b16 %v347
    %v755 = vunpack.c.h.b16 %v347
    %v756 = vunpack.c.l.b16 %v348
    %v757 = vunpack.c.l.b16 %v349
    %v758 = vunpack.c.h.b16 %v349
    %v759 = vunpack.c.l.b16 %v350
    %v760 = vunpack.c.l.b16 %v351
    %v761 = vunpack.c.h.b16 %v351
    %v762 = vunpack.c.l.b16 %v352
    %v763 = vunpack.c.l.b16 %v353
    %v764 = vunpack.c.h.b16 %v353
    %v765 = vunpack.c.l.b16 %v354
    %v766 = vunpack.c.l.b16 %v355
    %v767 = vunpack.c.h.b16 %v355
    %v768 = vunpack.c.l.b16 %v356
    %v769 = vunpack.c.l.b16 %v357
    %v770 = vunpack.c.h.b16 %v357
    %v771 = vunpack.c.l.b16 %v358
    %v772 = vunpack.c.l.b16 %v359
    %v773 = vunpack.c.h.b16 %v359
    %v774 = vunpack.c.l.b16 %v360
    %v775 = vunpack.c.l.b16 %v361
    %v776 = vunpack.c.h.b16 %v361
    %v777 = vunpack.c.l.b16 %v362
    %v778 = vunpack.c.l.b16 %v363
    %v779 = vunpack.c.h.b16 %v363
    %v780 = vunpack.c.l.b16 %v364
    %v781 = vunpack.c.l.b16 %v365
    %v782 = vunpack.c.h.b16 %v365
    %v783 = vunpack.c.l.b16 %v366
    %v784 = vunpack.c.l.b16 %v367
    %v785 = vunpack.c.h.b16 %v367
    %v786 = vunpack.c.l.b16 %v368
    %v787 = vunpack.c.l.b16 %v369
    %v788 = vunpack.c.h.b16 %v369
    %v789 = vunpack.c.l.b16 %v370
    %v790 = vunpack.c.l.b16 %v371
    %v791 = vunpack.c.h.b16 %v371
    %v792 = vunpack.c.l.b16 %v372
    %v793 = vunpack.c.l.b16 %v373
    %v794 = vunpack.c.h.b16 %v373
    %v795 = vunpack.c.l.b16 %v374
    %v796 = vunpack.c.l.b16 %v375
    %v797 = vunpack.c.h.b16 %v375
    %v798 = vunpack.c.l.b16 %v376
    %v799 = vunpack.c.l.b16 %v377
    %v800 = vunpack.c.h.b16 %v377
    %v801 = vunpack.c.l.b16 %v378
    %v802 = vunpack.c.l.b16 %v379
    %v803 = vunpack.c.h.b16 %v379
    %v804 = vunpack.c.l.b16 %v380
    %v805 = vunpack.c.l.b16 %v381
    %v806 = vunpack.c.h.b16 %v381
    %v807 = vunpack.c.l.b16 %v382
    %v808 = vunpack.c.l.b16 %v383
    %v809 = vunpack.c.h.b16 %v383
    %v810 = vunpack.c.l.b16 %v384
    %v811 = vunpack.c.l.b16 %v385
    %v812 = vunpack.c.h.b16 %v385
    %v813 = vunpack.c.l.b16 %v386
    %v814 = vunpack.c.l.b16 %v387
    %v815 = vunpack.c.h.b16 %v387
    %v816 = vunpack.c.l.b16 %v388
    %v817 = vunpack.c.l.b16 %v389
    %v818 = vunpack.c.h.b16 %v389
    %v819 = vunpack.c.l.b16 %v390
    %v820 = vunpack.c.l.b16 %v391
    %v821 = vunpack.c.h.b16 %v391
    %v822 = vunpack.c.l.b16 %v392
    %v823 = vunpack.c.l.b16 %v393
    %v824 = vunpack.c.h.b16 %v393
    %v825 = vunpack.c.l.b16 %v394
    %v826 = vunpack.c.l.b16 %v395
    %v827 = vunpack.c.h.b16 %v395
    %v828 = vunpack.c.l.b16 %v396
    %v829 = vunpack.c.l.b16 %v397
    %v830 = vunpack.c.h.b16 %v397
    %v831 = vunpack.c.l.b16 %v398
    %v832 = vunpack.c.l.b16 %v399
    %v833 = vunpack.c.h.b16 %v399
    %v834 = vunpack.c.l.b16 %v400
    %v835 = vunpack.c.l.b16 %v401
    %v836 = vunpack.c.h.b16 %v401
    %v837 = vunpack.c.l.b16 %v402
    %v838 = vunpack.c.l.b16 %v403
    %v839 = vunpack.c.h.b16 %v403
    %v840 = vunpack.c.l.b16 %v404
    %v841 = vunpack.c.l.b16 %v405
    %v842 = vunpack.c.h.b16 %v405
    %v843 = vunpack.c.l.b16 %v406
    %v844 = vunpack.c.l.b16 %v407
    %v845 = vunpack.c.h.b16 %v407
    %v846 = vunpack.c.l.b16 %v408
    %v847 = vunpack.c.l.b16 %v409
    %v848 = vunpack.c.h.b16 %v409
    %v849 = vunpack.c.l.b16 %v410
    %v850 = vunpack.c.l.b16 %v411
    %v851 = vunpack.c.h.b16 %v411
    %v852 = vunpack.c.l.b16 %v412
    %v853 = vunpack.c.l.b16 %v413
    %v854 = vunpack.c.h.b16 %v413
    %v855 = vunpack.c.l.b16 %v414
    %v856 = vpack.c.b16 %v667, %v664
    %v857 = vpack.c.b16 %v668, %v665
    %v858 = vpack.c.b16 %v669, %v666
    %v859 = vpack.c.b16 %v673, %v670
    %v860 = vpack.c.b16 %v674, %v671
    %v861 = vpack.c.b16 %v675, %v672
    %v862 = vpack.c.b16 %v679, %v676
    %v863 = vpack.c.b16 %v680, %v677
    %v864 = vpack.c.b16 %v681, %v678
    %v865 = vpack.c.b16 %v685, %v682
    %v866 = vpack.c.b16 %v686, %v683
    %v867 = vpack.c.b16 %v687, %v684
    %v868 = vpack.c.b16 %v691, %v688
    %v869 = vpack.c.b16 %v692, %v689
    %v870 = vpack.c.b16 %v693, %v690
    %v871 = vpack.c.b16 %v697, %v694
    %v872 = vpack.c.b16 %v698, %v695
    %v873 = vpack.c.b16 %v699, %v696
    %v874 = vpack.c.b16 %v703, %v700
    %v875 = vpack.c.b16 %v704, %v701
    %v876 = vpack.c.b16 %v705, %v702
    %v877 = vpack.c.b16 %v709, %v706
    %v878 = vpack.c.b16 %v710, %v707
    %v879 = vpack.c.b16 %v711, %v708
    %v880 = vpack.c.b16 %v715, %v712
    %v881 = vpack.c.b16 %v716, %v713
    %v882 = vpack.c.b16 %v717, %v714
    %v883 = vpack.c.b16 %v721, %v718
    %v884 = vpack.c.b16 %v722, %v719
    %v885 = vpack.c.b16 %v723, %v720
    %v886 = vpack.c.b16 %v727, %v724
    %v887 = vpack.c.b16 %v728, %v725
    %v888 = vpack.c.b16 %v729, %v726
    %v889 = vpack.c.b16 %v733, %v730
    %v890 = vpack.c.b16 %v734, %v731
    %v891 = vpack.c.b16 %v735, %v732
    %v892 = vpack.c.b16 %v739, %v736
    %v893 = vpack.c.b16 %v740, %v737
    %v894 = vpack.c.b16 %v741, %v738
    %v895 = vpack.c.b16 %v745, %v742
    %v896 = vpack.c.b16 %v746, %v743
    %v897 = vpack.c.b16 %v747, %v744
    %v898 = vpack.c.b16 %v751, %v748
    %v899 = vpack.c.b16 %v752, %v749
    %v900 = vpack.c.b16 %v753, %v750
    %v901 = vpack.c.b16 %v757, %v754
    %v902 = vpack.c.b16 %v758, %v755
    %v903 = vpack.c.b16 %v759, %v756
    %v904 = vpack.c.b16 %v763, %v760
    %v905 = vpack.c.b16 %v764, %v761
    %v906 = vpack.c.b16 %v765, %v762
    %v907 = vpack.c.b16 %v769, %v766
    %v908 = vpack.c.b16 %v770, %v767
    %v909 = vpack.c.b16 %v771, %v768
    %v910 = vpack.c.b16 %v775, %v772
    %v911 = vpack.c.b16 %v776, %v773
    %v912 = vpack.c.b16 %v777, %v774
    %v913 = vpack.c.b16 %v781, %v778
    %v914 = vpack.c.b16 %v782, %v779
    %v915 = vpack.c.b16 %v783, %v780
    %v916 = vpack.c.b16 %v787, %v784
    %v917 = vpack.c.b16 %v788, %v785
    %v918 = vpack.c.b16 %v789, %v786
    %v919 = vpack.c.b16 %v793, %v790
    %v920 = vpack.c.b16 %v794, %v791
    %v921 = vpack.c.b16 %v795, %v792
    %v922 = vpack.c.b16 %v799, %v796
    %v923 = vpack.c.b16 %v800, %v797
    %v924 = vpack.c.b16 %v801, %v798
    %v925 = vpack.c.b16 %v805, %v802
    %v926 = vpack.c.b16 %v806, %v803
    %v927 = vpack.c.b16 %v807, %v804
    %v928 = vpack.c.b16 %v811, %v808
    %v929 = vpack.c.b16 %v812, %v809
    %v930 = vpack.c.b16 %v813, %v810
    %v931 = vpack.c.b16 %v817, %v814
    %v932 = vpack.c.b16 %v818, %v815
    %v933 = vpack.c.b16 %v819, %v816
    %v934 = vpack.c.b16 %v823, %v820
    %v935 = vpack.c.b16 %v824, %v821
    %v936 = vpack.c.b16 %v825, %v822
    %v937 = vpack.c.b16 %v829, %v826
    %v938 = vpack.c.b16 %v830, %v827
    %v939 = vpack.c.b16 %v831, %v828
    %v940 = vpack.c.b16 %v835, %v832
    %v941 = vpack.c.b16 %v836, %v833
    %v942 = vpack.c.b16 %v837, %v834
    %v943 = vpack.c.b16 %v841, %v838
    %v944 = vpack.c.b16 %v842, %v839
    %v945 = vpack.c.b16 %v843, %v840
    %v946 = vpack.c.b16 %v847, %v844
    %v947 = vpack.c.b16 %v848, %v845
    %v948 = vpack.c.b16 %v849, %v846
    %v949 = vpack.c.b16 %v853, %v850
    %v950 = vpack.c.b16 %v854, %v851
    %v951 = vpack.c.b16 %v855, %v852
    %1048 = vmatpush.bf16.msra.mxu0 %v877
    %1049 = vmatpush.bf16.msra.mxu0 %v874
    %1050 = vmatpush.bf16.msra.mxu0 %v871
    %1051 = vmatpush.bf16.msra.mxu0 %v868
    %1052 = vmatpush.bf16.msra.mxu0 %v865
    %1053 = vmatpush.bf16.msra.mxu0 %v862
    %1054 = vmatpush.bf16.msra.mxu0 %v859
    %1055 = vmatpush.bf16.msra.mxu0 %v856
    %1056 = vmatmul.bf16.gmra.mxu0 %v271
    %v1057 = vpop.f32.mrf.mxu0
    %v1058 = vadd.f32 %v459, %v1057
    %v1059 = vpop.f32.mrf.mxu0
    %v1060 = vadd.f32 %v461, %v1059
    %1061 = vmatmul.bf16.gmra.mxu0 %v275
    %v1062 = vpop.f32.mrf.mxu0
    %v1063 = vadd.f32 %v464, %v1062
    %v1064 = vpop.f32.mrf.mxu0
    %v1065 = vadd.f32 %v466, %v1064
    %1066 = vmatmul.bf16.gmra.mxu0 %v279
    %v1067 = vpop.f32.mrf.mxu0
    %v1068 = vadd.f32 %v469, %v1067
    %v1069 = vpop.f32.mrf.mxu0
    %v1070 = vadd.f32 %v471, %v1069
    %1071 = vmatmul.bf16.gmra.mxu0 %v283
    %v1072 = vpop.f32.mrf.mxu0
    %v1073 = vadd.f32 %v474, %v1072
    %v1074 = vpop.f32.mrf.mxu0
    %v1075 = vadd.f32 %v476, %v1074
    %1076 = vdwg.mxu0
    %1077 = vmatpush.bf16.msra.mxu0 %v901
    %1078 = vmatpush.bf16.msra.mxu0 %v898
    %1079 = vmatpush.bf16.msra.mxu0 %v895
    %1080 = vmatpush.bf16.msra.mxu0 %v892
    %1081 = vmatpush.bf16.msra.mxu0 %v889
    %1082 = vmatpush.bf16.msra.mxu0 %v886
    %1083 = vmatpush.bf16.msra.mxu0 %v883
    %1084 = vmatpush.bf16.msra.mxu0 %v880
    %1085 = vmatmul.bf16.gmra.mxu0 %v272
    %v1086 = vpop.f32.mrf.mxu0
    %v1087 = vadd.f32 %v1058, %v1086
    %v1088 = vpop.f32.mrf.mxu0
    %v1089 = vadd.f32 %v1060, %v1088
    %1090 = vmatmul.bf16.gmra.mxu0 %v276
    %v1091 = vpop.f32.mrf.mxu0
    %v1092 = vadd.f32 %v1063, %v1091
    %v1093 = vpop.f32.mrf.mxu0
    %v1094 = vadd.f32 %v1065, %v1093
    %1095 = vmatmul.bf16.gmra.mxu0 %v280
    %v1096 = vpop.f32.mrf.mxu0
    %v1097 = vadd.f32 %v1068, %v1096
    %v1098 = vpop.f32.mrf.mxu0
    %v1099 = vadd.f32 %v1070, %v1098
    %1100 = vmatmul.bf16.gmra.mxu0 %v284
    %v1101 = vpop.f32.mrf.mxu0
    %v1102 = vadd.f32 %v1073, %v1101
    %v1103 = vpop.f32.mrf.mxu0
    %v1104 = vadd.f32 %v1075, %v1103
    %1105 = vdwg.mxu0
    %1106 = vmatpush.bf16.msra.mxu0 %v925
    %1107 = vmatpush.bf16.msra.mxu0 %v922
    %1108 = vmatpush.bf16.msra.mxu0 %v919
    %1109 = vmatpush.bf16.msra.mxu0 %v916
    %1110 = vmatpush.bf16.msra.mxu0 %v913
    %1111 = vmatpush.bf16.msra.mxu0 %v910
    %1112 = vmatpush.bf16.msra.mxu0 %v907
    %1113 = vmatpush.bf16.msra.mxu0 %v904
    %1114 = vmatmul.bf16.gmra.mxu0 %v273
    %v1115 = vpop.f32.mrf.mxu0
    %v1116 = vadd.f32 %v1087, %v1115
    %v1117 = vpop.f32.mrf.mxu0
    %v1118 = vadd.f32 %v1089, %v1117
    %1119 = vmatmul.bf16.gmra.mxu0 %v277
    %v1120 = vpop.f32.mrf.mxu0
    %v1121 = vadd.f32 %v1092, %v1120
    %v1122 = vpop.f32.mrf.mxu0
    %v1123 = vadd.f32 %v1094, %v1122
    %1124 = vmatmul.bf16.gmra.mxu0 %v281
    %v1125 = vpop.f32.mrf.mxu0
    %v1126 = vadd.f32 %v1097, %v1125
    %v1127 = vpop.f32.mrf.mxu0
    %v1128 = vadd.f32 %v1099, %v1127
    %1129 = vmatmul.bf16.gmra.mxu0 %v285
    %v1130 = vpop.f32.mrf.mxu0
    %v1131 = vadd.f32 %v1102, %v1130
    %v1132 = vpop.f32.mrf.mxu0
    %v1133 = vadd.f32 %v1104, %v1132
    %1134 = vdwg.mxu0
    %1135 = vmatpush.bf16.msra.mxu0 %v949
    %1136 = vmatpush.bf16.msra.mxu0 %v946
    %1137 = vmatpush.bf16.msra.mxu0 %v943
    %1138 = vmatpush.bf16.msra.mxu0 %v940
    %1139 = vmatpush.bf16.msra.mxu0 %v937
    %1140 = vmatpush.bf16.msra.mxu0 %v934
    %1141 = vmatpush.bf16.msra.mxu0 %v931
    %1142 = vmatpush.bf16.msra.mxu0 %v928
    %1143 = vmatmul.bf16.gmra.mxu0 %v274
    %v1144 = vpop.f32.mrf.mxu0
    %v1145 = vadd.f32 %v1116, %v1144
    %v1146 = vpop.f32.mrf.mxu0
    %v1147 = vadd.f32 %v1118, %v1146
    %1148 = vmatmul.bf16.gmra.mxu0 %v278
    %v1149 = vpop.f32.mrf.mxu0
    %v1150 = vadd.f32 %v1121, %v1149
    %v1151 = vpop.f32.mrf.mxu0
    %v1152 = vadd.f32 %v1123, %v1151
    %1153 = vmatmul.bf16.gmra.mxu0 %v282
    %v1154 = vpop.f32.mrf.mxu0
    %v1155 = vadd.f32 %v1126, %v1154
    %v1156 = vpop.f32.mrf.mxu0
    %v1157 = vadd.f32 %v1128, %v1156
    %1158 = vmatmul.bf16.gmra.mxu0 %v286
    %v1159 = vpop.f32.mrf.mxu0
    %v1160 = vadd.f32 %v1131, %v1159
    %v1161 = vpop.f32.mrf.mxu0
    %v1162 = vadd.f32 %v1133, %v1161
    %1163 = vdwg.mxu0
    %1164 = vmatpush.bf16.msra.mxu0 %v878
    %1165 = vmatpush.bf16.msra.mxu0 %v875
    %1166 = vmatpush.bf16.msra.mxu0 %v872
    %1167 = vmatpush.bf16.msra.mxu0 %v869
    %1168 = vmatpush.bf16.msra.mxu0 %v866
    %1169 = vmatpush.bf16.msra.mxu0 %v863
    %1170 = vmatpush.bf16.msra.mxu0 %v860
    %1171 = vmatpush.bf16.msra.mxu0 %v857
    %1172 = vmatmul.bf16.gmra.mxu0 %v271
    %v1173 = vpop.f32.mrf.mxu0
    %v1174 = vadd.f32 %v488, %v1173
    %v1175 = vpop.f32.mrf.mxu0
    %v1176 = vadd.f32 %v490, %v1175
    %1177 = vmatmul.bf16.gmra.mxu0 %v275
    %v1178 = vpop.f32.mrf.mxu0
    %v1179 = vadd.f32 %v493, %v1178
    %v1180 = vpop.f32.mrf.mxu0
    %v1181 = vadd.f32 %v495, %v1180
    %1182 = vmatmul.bf16.gmra.mxu0 %v279
    %v1183 = vpop.f32.mrf.mxu0
    %v1184 = vadd.f32 %v498, %v1183
    %v1185 = vpop.f32.mrf.mxu0
    %v1186 = vadd.f32 %v500, %v1185
    %1187 = vmatmul.bf16.gmra.mxu0 %v283
    %v1188 = vpop.f32.mrf.mxu0
    %v1189 = vadd.f32 %v503, %v1188
    %v1190 = vpop.f32.mrf.mxu0
    %v1191 = vadd.f32 %v505, %v1190
    %1192 = vdwg.mxu0
    %1193 = vmatpush.bf16.msra.mxu0 %v902
    %1194 = vmatpush.bf16.msra.mxu0 %v899
    %1195 = vmatpush.bf16.msra.mxu0 %v896
    %1196 = vmatpush.bf16.msra.mxu0 %v893
    %1197 = vmatpush.bf16.msra.mxu0 %v890
    %1198 = vmatpush.bf16.msra.mxu0 %v887
    %1199 = vmatpush.bf16.msra.mxu0 %v884
    %1200 = vmatpush.bf16.msra.mxu0 %v881
    %1201 = vmatmul.bf16.gmra.mxu0 %v272
    %v1202 = vpop.f32.mrf.mxu0
    %v1203 = vadd.f32 %v1174, %v1202
    %v1204 = vpop.f32.mrf.mxu0
    %v1205 = vadd.f32 %v1176, %v1204
    %1206 = vmatmul.bf16.gmra.mxu0 %v276
    %v1207 = vpop.f32.mrf.mxu0
    %v1208 = vadd.f32 %v1179, %v1207
    %v1209 = vpop.f32.mrf.mxu0
    %v1210 = vadd.f32 %v1181, %v1209
    %1211 = vmatmul.bf16.gmra.mxu0 %v280
    %v1212 = vpop.f32.mrf.mxu0
    %v1213 = vadd.f32 %v1184, %v1212
    %v1214 = vpop.f32.mrf.mxu0
    %v1215 = vadd.f32 %v1186, %v1214
    %1216 = vmatmul.bf16.gmra.mxu0 %v284
    %v1217 = vpop.f32.mrf.mxu0
    %v1218 = vadd.f32 %v1189, %v1217
    %v1219 = vpop.f32.mrf.mxu0
    %v1220 = vadd.f32 %v1191, %v1219
    %1221 = vdwg.mxu0
    %1222 = vmatpush.bf16.msra.mxu0 %v926
    %1223 = vmatpush.bf16.msra.mxu0 %v923
    %1224 = vmatpush.bf16.msra.mxu0 %v920
    %1225 = vmatpush.bf16.msra.mxu0 %v917
    %1226 = vmatpush.bf16.msra.mxu0 %v914
    %1227 = vmatpush.bf16.msra.mxu0 %v911
    %1228 = vmatpush.bf16.msra.mxu0 %v908
    %1229 = vmatpush.bf16.msra.mxu0 %v905
    %1230 = vmatmul.bf16.gmra.mxu0 %v273
    %v1231 = vpop.f32.mrf.mxu0
    %v1232 = vadd.f32 %v1203, %v1231
    %v1233 = vpop.f32.mrf.mxu0
    %v1234 = vadd.f32 %v1205, %v1233
    %1235 = vmatmul.bf16.gmra.mxu0 %v277
    %v1236 = vpop.f32.mrf.mxu0
    %v1237 = vadd.f32 %v1208, %v1236
    %v1238 = vpop.f32.mrf.mxu0
    %v1239 = vadd.f32 %v1210, %v1238
    %1240 = vmatmul.bf16.gmra.mxu0 %v281
    %v1241 = vpop.f32.mrf.mxu0
    %v1242 = vadd.f32 %v1213, %v1241
    %v1243 = vpop.f32.mrf.mxu0
    %v1244 = vadd.f32 %v1215, %v1243
    %1245 = vmatmul.bf16.gmra.mxu0 %v285
    %v1246 = vpop.f32.mrf.mxu0
    %v1247 = vadd.f32 %v1218, %v1246
    %v1248 = vpop.f32.mrf.mxu0
    %v1249 = vadd.f32 %v1220, %v1248
    %1250 = vdwg.mxu0
    %1251 = vmatpush.bf16.msra.mxu0 %v950
    %1252 = vmatpush.bf16.msra.mxu0 %v947
    %1253 = vmatpush.bf16.msra.mxu0 %v944
    %1254 = vmatpush.bf16.msra.mxu0 %v941
    %1255 = vmatpush.bf16.msra.mxu0 %v938
    %1256 = vmatpush.bf16.msra.mxu0 %v935
    %1257 = vmatpush.bf16.msra.mxu0 %v932
    %1258 = vmatpush.bf16.msra.mxu0 %v929
    %1259 = vmatmul.bf16.gmra.mxu0 %v274
    %v1260 = vpop.f32.mrf.mxu0
    %v1261 = vadd.f32 %v1232, %v1260
    %v1262 = vpop.f32.mrf.mxu0
    %v1263 = vadd.f32 %v1234, %v1262
    %1264 = vmatmul.bf16.gmra.mxu0 %v278
    %v1265 = vpop.f32.mrf.mxu0
    %v1266 = vadd.f32 %v1237, %v1265
    %v1267 = vpop.f32.mrf.mxu0
    %v1268 = vadd.f32 %v1239, %v1267
    %1269 = vmatmul.bf16.gmra.mxu0 %v282
    %v1270 = vpop.f32.mrf.mxu0
    %v1271 = vadd.f32 %v1242, %v1270
    %v1272 = vpop.f32.mrf.mxu0
    %v1273 = vadd.f32 %v1244, %v1272
    %1274 = vmatmul.bf16.gmra.mxu0 %v286
    %v1275 = vpop.f32.mrf.mxu0
    %v1276 = vadd.f32 %v1247, %v1275
    %v1277 = vpop.f32.mrf.mxu0
    %v1278 = vadd.f32 %v1249, %v1277
    %1279 = vdwg.mxu0
    %1280 = vmatpush.bf16.msra.mxu0 %v879
    %1281 = vmatpush.bf16.msra.mxu0 %v876
    %1282 = vmatpush.bf16.msra.mxu0 %v873
    %1283 = vmatpush.bf16.msra.mxu0 %v870
    %1284 = vmatpush.bf16.msra.mxu0 %v867
    %1285 = vmatpush.bf16.msra.mxu0 %v864
    %1286 = vmatpush.bf16.msra.mxu0 %v861
    %1287 = vmatpush.bf16.msra.mxu0 %v858
    %1288 = vmatmul.bf16.gmra.mxu0 %v271
    %v1289 = vpop.f32.mrf.mxu0
    %v1290 = vadd.f32 %v517, %v1289
    %v1291 = vpop.f32.mrf.mxu0
    %v1292 = vadd.f32 %v519, %v1291
    %1293 = vmatmul.bf16.gmra.mxu0 %v275
    %v1294 = vpop.f32.mrf.mxu0
    %v1295 = vadd.f32 %v522, %v1294
    %v1296 = vpop.f32.mrf.mxu0
    %v1297 = vadd.f32 %v524, %v1296
    %1298 = vmatmul.bf16.gmra.mxu0 %v279
    %v1299 = vpop.f32.mrf.mxu0
    %v1300 = vadd.f32 %v527, %v1299
    %v1301 = vpop.f32.mrf.mxu0
    %v1302 = vadd.f32 %v529, %v1301
    %1303 = vmatmul.bf16.gmra.mxu0 %v283
    %v1304 = vpop.f32.mrf.mxu0
    %v1305 = vadd.f32 %v532, %v1304
    %v1306 = vpop.f32.mrf.mxu0
    %v1307 = vadd.f32 %v534, %v1306
    %1308 = vdwg.mxu0
    %1309 = vmatpush.bf16.msra.mxu0 %v903
    %1310 = vmatpush.bf16.msra.mxu0 %v900
    %1311 = vmatpush.bf16.msra.mxu0 %v897
    %1312 = vmatpush.bf16.msra.mxu0 %v894
    %1313 = vmatpush.bf16.msra.mxu0 %v891
    %1314 = vmatpush.bf16.msra.mxu0 %v888
    %1315 = vmatpush.bf16.msra.mxu0 %v885
    %1316 = vmatpush.bf16.msra.mxu0 %v882
    %1317 = vmatmul.bf16.gmra.mxu0 %v272
    %v1318 = vpop.f32.mrf.mxu0
    %v1319 = vadd.f32 %v1290, %v1318
    %v1320 = vpop.f32.mrf.mxu0
    %v1321 = vadd.f32 %v1292, %v1320
    %1322 = vmatmul.bf16.gmra.mxu0 %v276
    %v1323 = vpop.f32.mrf.mxu0
    %v1324 = vadd.f32 %v1295, %v1323
    %v1325 = vpop.f32.mrf.mxu0
    %v1326 = vadd.f32 %v1297, %v1325
    %1327 = vmatmul.bf16.gmra.mxu0 %v280
    %v1328 = vpop.f32.mrf.mxu0
    %v1329 = vadd.f32 %v1300, %v1328
    %v1330 = vpop.f32.mrf.mxu0
    %v1331 = vadd.f32 %v1302, %v1330
    %1332 = vmatmul.bf16.gmra.mxu0 %v284
    %v1333 = vpop.f32.mrf.mxu0
    %v1334 = vadd.f32 %v1305, %v1333
    %v1335 = vpop.f32.mrf.mxu0
    %v1336 = vadd.f32 %v1307, %v1335
    %1337 = vdwg.mxu0
    %1338 = vmatpush.bf16.msra.mxu0 %v927
    %1339 = vmatpush.bf16.msra.mxu0 %v924
    %1340 = vmatpush.bf16.msra.mxu0 %v921
    %1341 = vmatpush.bf16.msra.mxu0 %v918
    %1342 = vmatpush.bf16.msra.mxu0 %v915
    %1343 = vmatpush.bf16.msra.mxu0 %v912
    %1344 = vmatpush.bf16.msra.mxu0 %v909
    %1345 = vmatpush.bf16.msra.mxu0 %v906
    %1346 = vmatmul.bf16.gmra.mxu0 %v273
    %v1347 = vpop.f32.mrf.mxu0
    %v1348 = vadd.f32 %v1319, %v1347
    %v1349 = vpop.f32.mrf.mxu0
    %v1350 = vadd.f32 %v1321, %v1349
    %1351 = vmatmul.bf16.gmra.mxu0 %v277
    %v1352 = vpop.f32.mrf.mxu0
    %v1353 = vadd.f32 %v1324, %v1352
    %v1354 = vpop.f32.mrf.mxu0
    %v1355 = vadd.f32 %v1326, %v1354
    %1356 = vmatmul.bf16.gmra.mxu0 %v281
    %v1357 = vpop.f32.mrf.mxu0
    %v1358 = vadd.f32 %v1329, %v1357
    %v1359 = vpop.f32.mrf.mxu0
    %v1360 = vadd.f32 %v1331, %v1359
    %1361 = vmatmul.bf16.gmra.mxu0 %v285
    %v1362 = vpop.f32.mrf.mxu0
    %v1363 = vadd.f32 %v1334, %v1362
    %v1364 = vpop.f32.mrf.mxu0
    %v1365 = vadd.f32 %v1336, %v1364
    %1366 = vdwg.mxu0
    %1367 = vmatpush.bf16.msra.mxu0 %v951
    %1368 = vmatpush.bf16.msra.mxu0 %v948
    %1369 = vmatpush.bf16.msra.mxu0 %v945
    %1370 = vmatpush.bf16.msra.mxu0 %v942
    %1371 = vmatpush.bf16.msra.mxu0 %v939
    %1372 = vmatpush.bf16.msra.mxu0 %v936
    %1373 = vmatpush.bf16.msra.mxu0 %v933
    %1374 = vmatpush.bf16.msra.mxu0 %v930
    %1375 = vmatmul.bf16.gmra.mxu0 %v274
    %v1376 = vpop.f32.mrf.mxu0
    %v1377 = vadd.f32 %v1348, %v1376
    %v1378 = vpop.f32.mrf.mxu0
    %v1379 = vadd.f32 %v1350, %v1378
    %1380 = vmatmul.bf16.gmra.mxu0 %v278
    %v1381 = vpop.f32.mrf.mxu0
    %v1382 = vadd.f32 %v1353, %v1381
    %v1383 = vpop.f32.mrf.mxu0
    %v1384 = vadd.f32 %v1355, %v1383
    %1385 = vmatmul.bf16.gmra.mxu0 %v282
    %v1386 = vpop.f32.mrf.mxu0
    %v1387 = vadd.f32 %v1358, %v1386
    %v1388 = vpop.f32.mrf.mxu0
    %v1389 = vadd.f32 %v1360, %v1388
    %1390 = vmatmul.bf16.gmra.mxu0 %v286
    %v1391 = vpop.f32.mrf.mxu0
    %v1392 = vadd.f32 %v1363, %v1391
    %v1393 = vpop.f32.mrf.mxu0
    %v1394 = vadd.f32 %v1365, %v1393
    %1395 = vdwg.mxu0
    %v1396 = vld [vmem:[%s5] sm:$0x7]
    %v1398 = vperm.slane %v1396, 0
    %v1399 = vperm.slane %v1396, 1
    %v1400 = vperm.slane %v1396, 2
    %v1404 = vadd.f32 %v1145, %v1398
    %v1405 = vadd.f32 %v1261, %v1399
    %v1406 = vadd.f32 %v1377, %v1400
    %v1407 = vadd.f32 %v1147, %v1398
    %v1408 = vadd.f32 %v1263, %v1399
    %v1409 = vadd.f32 %v1379, %v1400
    %v1410 = vadd.f32 %v1150, %v1398
    %v1411 = vadd.f32 %v1266, %v1399
    %v1412 = vadd.f32 %v1382, %v1400
    %v1413 = vadd.f32 %v1152, %v1398
    %v1414 = vadd.f32 %v1268, %v1399
    %v1415 = vadd.f32 %v1384, %v1400
    %v1416 = vadd.f32 %v1155, %v1398
    %v1417 = vadd.f32 %v1271, %v1399
    %v1418 = vadd.f32 %v1387, %v1400
    %v1419 = vadd.f32 %v1157, %v1398
    %v1420 = vadd.f32 %v1273, %v1399
    %v1421 = vadd.f32 %v1389, %v1400
    %v1422 = vadd.f32 %v1160, %v1398
    %v1423 = vadd.f32 %v1276, %v1399
    %v1424 = vadd.f32 %v1392, %v1400
    %v1425 = vadd.f32 %v1162, %v1398
    %v1426 = vadd.f32 %v1278, %v1399
    %v1427 = vadd.f32 %v1394, %v1400
    %v1428 = vmax.f32 %v1404, 0.0
    %v1429 = vmax.f32 %v1405, 0.0
    %v1430 = vmax.f32 %v1406, 0.0
    %v1431 = vmax.f32 %v1407, 0.0
    %v1432 = vmax.f32 %v1408, 0.0
    %v1433 = vmax.f32 %v1409, 0.0
    %v1434 = vmax.f32 %v1410, 0.0
    %v1435 = vmax.f32 %v1411, 0.0
    %v1436 = vmax.f32 %v1412, 0.0
    %v1437 = vmax.f32 %v1413, 0.0
    %v1438 = vmax.f32 %v1414, 0.0
    %v1439 = vmax.f32 %v1415, 0.0
    %v1440 = vmax.f32 %v1416, 0.0
    %v1441 = vmax.f32 %v1417, 0.0
    %v1442 = vmax.f32 %v1418, 0.0
    %v1443 = vmax.f32 %v1419, 0.0
    %v1444 = vmax.f32 %v1420, 0.0
    %v1445 = vmax.f32 %v1421, 0.0
    %v1446 = vmax.f32 %v1422, 0.0
    %v1447 = vmax.f32 %v1423, 0.0
    %v1448 = vmax.f32 %v1424, 0.0
    %v1449 = vmax.f32 %v1425, 0.0
    %v1450 = vmax.f32 %v1426, 0.0
    %v1451 = vmax.f32 %v1427, 0.0
    %v1452 = vld [vmem:[%s6] sm:$0x7]
    %v1454 = vperm.slane %v1452, 0
    %v1455 = vperm.slane %v1452, 1
    %v1456 = vperm.slane %v1452, 2
    %v1460 = vmul.f32 %v1428, %v1454
    %v1461 = vmul.f32 %v1429, %v1455
    %v1462 = vmul.f32 %v1430, %v1456
    %v1463 = vmul.f32 %v1431, %v1454
    %v1464 = vmul.f32 %v1432, %v1455
    %v1465 = vmul.f32 %v1433, %v1456
    %v1466 = vmul.f32 %v1434, %v1454
    %v1467 = vmul.f32 %v1435, %v1455
    %v1468 = vmul.f32 %v1436, %v1456
    %v1469 = vmul.f32 %v1437, %v1454
    %v1470 = vmul.f32 %v1438, %v1455
    %v1471 = vmul.f32 %v1439, %v1456
    %v1472 = vmul.f32 %v1440, %v1454
    %v1473 = vmul.f32 %v1441, %v1455
    %v1474 = vmul.f32 %v1442, %v1456
    %v1475 = vmul.f32 %v1443, %v1454
    %v1476 = vmul.f32 %v1444, %v1455
    %v1477 = vmul.f32 %v1445, %v1456
    %v1478 = vmul.f32 %v1446, %v1454
    %v1479 = vmul.f32 %v1447, %v1455
    %v1480 = vmul.f32 %v1448, %v1456
    %v1481 = vmul.f32 %v1449, %v1454
    %v1482 = vmul.f32 %v1450, %v1455
    %v1483 = vmul.f32 %v1451, %v1456
    %v1484 = vadd.f32 %v1460, %v1461
    %v1485 = vadd.f32 %v1484, %v1462
    %1486 = vadd.xlane.f32.xlu0 %v1485
    %v1487 = vpop.xlane.xlu0 %1486
    %v1488 = vadd.f32 %v1463, %v1464
    %v1489 = vadd.f32 %v1488, %v1465
    %1490 = vadd.xlane.f32.xlu0 %v1489
    %v1491 = vpop.xlane.xlu0 %1490
    %v1492 = vadd.f32 %v1466, %v1467
    %v1493 = vadd.f32 %v1492, %v1468
    %1494 = vadd.xlane.f32.xlu0 %v1493
    %v1495 = vpop.xlane.xlu0 %1494
    %v1496 = vadd.f32 %v1469, %v1470
    %v1497 = vadd.f32 %v1496, %v1471
    %1498 = vadd.xlane.f32.xlu0 %v1497
    %v1499 = vpop.xlane.xlu0 %1498
    %v1500 = vadd.f32 %v1472, %v1473
    %v1501 = vadd.f32 %v1500, %v1474
    %1502 = vadd.xlane.f32.xlu0 %v1501
    %v1503 = vpop.xlane.xlu0 %1502
    %v1504 = vadd.f32 %v1475, %v1476
    %v1505 = vadd.f32 %v1504, %v1477
    %1506 = vadd.xlane.f32.xlu0 %v1505
    %v1507 = vpop.xlane.xlu0 %1506
    %v1508 = vadd.f32 %v1478, %v1479
    %v1509 = vadd.f32 %v1508, %v1480
    %1510 = vadd.xlane.f32.xlu0 %v1509
    %v1511 = vpop.xlane.xlu0 %1510
    %v1512 = vadd.f32 %v1481, %v1482
    %v1513 = vadd.f32 %v1512, %v1483
    %1514 = vadd.xlane.f32.xlu0 %v1513
    %v1515 = vpop.xlane.xlu0 %1514
    %v1516 = vld [vmem:[#allocation2] sm:$0x1]
    %v1518 = vperm.slane %v1516, 0
    %v1520 = vadd.f32 %v1487, %v1518
    %v1521 = vadd.f32 %v1491, %v1518
    %v1522 = vadd.f32 %v1495, %v1518
    %v1523 = vadd.f32 %v1499, %v1518
    %v1524 = vadd.f32 %v1503, %v1518
    %v1525 = vadd.f32 %v1507, %v1518
    %v1526 = vadd.f32 %v1511, %v1518
    %v1527 = vadd.f32 %v1515, %v1518
    %vm1528 = vcmask 7168
    %1529 = vst.msk [vmem:[%s8] sm:$0xff] %vm1528, %v1520
    %1530 = vst.msk [vmem:[%s8 + $0x8] sm:$0xff] %vm1528, %v1521
    %1531 = vst.msk [vmem:[%s8 + $0x10] sm:$0xff] %vm1528, %v1522
    %1532 = vst.msk [vmem:[%s8 + $0x18] sm:$0xff] %vm1528, %v1523
    %1533 = vst.msk [vmem:[%s8 + $0x20] sm:$0xff] %vm1528, %v1524
    %1534 = vst.msk [vmem:[%s8 + $0x28] sm:$0xff] %vm1528, %v1525
    %1535 = vst.msk [vmem:[%s8 + $0x30] sm:$0xff] %vm1528, %v1526
    %1536 = vst.msk [vmem:[%s8 + $0x38] sm:$0xff] %vm1528, %v1527
    // Predicated region
    $region38: #{tpu_custom_call.1} parent=1 // pred_check
      _
    $region39: #{tpu_custom_call.1} parent=1 // pred_check_branch
      %1538 = sbr.rel (0) target = $region41
    $region40: #{tpu_custom_call.1} parent=1 // pred_region
      _
    $region41: #{tpu_custom_call.1} parent=1 // pred_fallthru
      _
    // Predicated region
    $region42: #{tpu_custom_call.1} parent=1 // pred_check
      _
    $region43: #{tpu_custom_call.1} parent=1 // pred_check_branch
      %1540 = sbr.rel (0) target = $region45
    $region44: #{tpu_custom_call.1} parent=1 // pred_region
      _
    $region45: #{tpu_custom_call.1} parent=1 // pred_fallthru
      _
    %1541 = vsyncpa [#allocation4], 1

</llo_original>
